<compile_context>
chip_gen: v6e
topology: v6e:2x2x1
jax: 0.10.0
libtpu: 0.0.40
codegen_flags: <defaults>
</compile_context>

<pallas_src>
import numpy as np
import jax
import jax.numpy as jnp
from jax.experimental import pallas as pl
from jax.experimental.pallas import tpu as pltpu


def _round_up(x, m):
    return ((x + m - 1) // m) * m


def _make_kernel(N, TILE_R, Kp):
    inv_nm1 = 1.0 / (N - 1)

    def kernel(preds_ref, labels_ref, wf_ref, wi_ref, use_ref, out_ref):
        p = preds_ref[...]                       # (T, N) f32
        l = labels_ref[...]                      # (T, N) f32

        # mean-subtract along time (dim=3 in the torch module)
        p_n = p - jnp.mean(p, axis=1, keepdims=True)
        l_n = l - jnp.mean(l, axis=1, keepdims=True)

        # Fused forward real-DFT of the (implicitly zero-padded) signals.
        # Wf = [cosF | -sinF] so columns give Re / Im directly.
        stacked = jnp.concatenate([p_n, l_n], axis=0).astype(jnp.bfloat16)      # (2T, N)
        S = jnp.dot(stacked, wf_ref[...], preferred_element_type=jnp.float32)   # (2T, 2Kp)

        PF = S[:TILE_R, :]                       # preds spectrum [Re | Im]
        LF = S[TILE_R:, :]                       # labels spectrum [Re | Im]
        Pr, Pi = PF[:, :Kp], PF[:, Kp:]
        Lr, Li = LF[:, :Kp], LF[:, Kp:]

        # X = preds_fft * conj(labels_fft)
        Xr = Pr * Lr + Pi * Li
        Xi = Pi * Lr - Pr * Li

        # band-pass energy ratio (padded bins have zero magnitude by construction)
        mag = jnp.sqrt(Xr * Xr + Xi * Xi)
        use = use_ref[...]                                        # (1, Kp)
        use_energy = jnp.sum(mag * use, axis=1, keepdims=True)    # (T, 1)
        total_energy = jnp.sum(mag, axis=1, keepdims=True)        # = use + zero energy
        energy_ratio = use_energy / total_energy

        # Fused inverse real-DFT; band mask, irfft weights, 1/M and 1/(min_N-1)
        # are pre-baked into Wi on the host.
        xc = jnp.concatenate([Xr, Xi], axis=1).astype(jnp.bfloat16)             # (T, 2Kp)
        cc = jnp.dot(xc, wi_ref[...], preferred_element_type=jnp.float32)       # (T, M)

        max_cc = jnp.max(cc, axis=1, keepdims=True) / energy_ratio
        cov = -max_cc                                              # NegativeMaxCrossCov

        # torch.std (unbiased, ddof=1) along time
        p_var = jnp.sum(p_n * p_n, axis=1, keepdims=True) * inv_nm1
        l_var = jnp.sum(l_n * l_n, axis=1, keepdims=True) * inv_nm1
        denom = jnp.sqrt(p_var * l_var)

        out_ref[...] = cov / denom                                 # (T, 1) per-row result

    return kernel


def negative_max_cross_corr(preds, labels, high_pass, low_pass, Fs=30):
    """Pallas implementation of NegativeMaxCrossCorr(high_pass, low_pass).forward."""
    B, C, H, N = preds.shape
    assert labels.shape == preds.shape
    R = B * C * H
    min_N = N
    M = 2 * N                  # padded_N
    K = M // 2 + 1             # rfft bins
    Kp = _round_up(K, 128)     # lane-dense padded bin count (padded bins are zero)

    # ---- host-built constant matrices (f64 math, stored bf16) ----
    n = np.arange(N, dtype=np.float64)[:, None]
    k = np.arange(Kp, dtype=np.float64)[None, :]
    valid = (np.arange(Kp) < K).astype(np.float64)[None, :]
    ang_f = 2.0 * np.pi * n * k / M
    cosF = np.cos(ang_f) * valid
    sinF = np.sin(ang_f) * valid
    Wf = np.concatenate([cosF, -sinF], axis=1)           # (N, 2*Kp)

    Fn = Fs / 2.0
    freqs = np.linspace(0.0, Fn, K)
    use = np.zeros((Kp,), dtype=np.float64)
    use[:K] = np.logical_and(freqs <= high_pass / 60.0,
                             freqs >= low_pass / 60.0).astype(np.float64)

    w = np.full((Kp,), 2.0, dtype=np.float64)             # irfft symmetry weights
    w[0] = 1.0
    w[K - 1] = 1.0                                        # Nyquist
    row_scale = (use * w / (M * (min_N - 1)))[:, None]    # fold 1/M and 1/(min_N-1)

    kk = np.arange(Kp, dtype=np.float64)[:, None]
    nn = np.arange(M, dtype=np.float64)[None, :]
    ang_i = 2.0 * np.pi * kk * nn / M
    cosI = np.cos(ang_i) * row_scale
    sinI = np.sin(ang_i) * row_scale
    Wi = np.concatenate([cosI, -sinI], axis=0)            # (2*Kp, M)
    # TODO(synk): for very large N, tile the (2*Kp, M) inverse-DFT matrix over an
    # extra reduction grid axis instead of keeping it fully resident in VMEM.

    wf = jnp.asarray(Wf, jnp.bfloat16)
    wi = jnp.asarray(Wi, jnp.bfloat16)
    use_mask = jnp.asarray(use[None, :], jnp.float32)     # (1, Kp)

    # ---- tile R so the HBM->VMEM DMA pipelines with the MXU work ----
    TILE_R = min(256, _round_up(R, 8))
    Rp = _round_up(R, TILE_R)
    p2 = preds.reshape(R, N).astype(jnp.float32)
    l2 = labels.reshape(R, N).astype(jnp.float32)
    if Rp != R:
        p2 = jnp.pad(p2, ((0, Rp - R), (0, 0)))
        l2 = jnp.pad(l2, ((0, Rp - R), (0, 0)))

    kernel = _make_kernel(N, TILE_R, Kp)
    grid = (Rp // TILE_R,)

    out = pl.pallas_call(
        kernel,
        grid=grid,
        in_specs=[
            pl.BlockSpec((TILE_R, N), lambda i: (i, 0)),      # preds tile
            pl.BlockSpec((TILE_R, N), lambda i: (i, 0)),      # labels tile
            pl.BlockSpec((N, 2 * Kp), lambda i: (0, 0)),      # forward DFT matrix (invariant)
            pl.BlockSpec((2 * Kp, M), lambda i: (0, 0)),      # inverse DFT matrix (invariant)
            pl.BlockSpec((1, Kp), lambda i: (0, 0)),          # band mask
        ],
        out_specs=pl.BlockSpec((TILE_R, 1), lambda i: (i, 0)),
        out_shape=jax.ShapeDtypeStruct((Rp, 1), jnp.float32),
        compiler_params=pltpu.CompilerParams(
            dimension_semantics=("parallel",)),
    )(p2, l2, wf, wi, use_mask)

    # final mean (only the real R rows; padded rows are discarded)
    return 1.0 + jnp.mean(out[:R, 0])


def _reference(preds, labels, high_pass, low_pass, Fs=30):
    """Pure-JAX reference matching the PyTorch module (uses jnp.fft)."""
    N = preds.shape[-1]
    min_N = N
    padded_N = 2 * N
    preds_norm = preds - jnp.mean(preds, axis=3, keepdims=True)
    labels_norm = labels - jnp.mean(labels, axis=3, keepdims=True)
    pad = ((0, 0), (0, 0), (0, 0), (0, padded_N - N))
    Pf = jnp.fft.rfft(jnp.pad(preds_norm, pad), axis=-1)
    Lf = jnp.fft.rfft(jnp.pad(labels_norm, pad), axis=-1)
    X = Pf * jnp.conj(Lf)
    K = X.shape[-1]
    freqs = jnp.linspace(0.0, Fs / 2.0, K)
    use = jnp.logical_and(freqs <= high_pass / 60.0, freqs >= low_pass / 60.0)
    mag = jnp.abs(X)
    use_e = jnp.sum(jnp.where(use, mag, 0.0), axis=-1)
    zero_e = jnp.sum(jnp.where(use, 0.0, mag), axis=-1)
    ratio = use_e / (use_e + zero_e)
    Xm = jnp.where(use, X, 0.0)
    cc = jnp.fft.irfft(Xm, axis=-1) / (min_N - 1)
    max_cc = jnp.max(cc, axis=-1) / ratio
    cov = -max_cc
    denom = jnp.std(preds, axis=-1, ddof=1) * jnp.std(labels, axis=-1, ddof=1)
    return 1.0 + jnp.mean(cov / denom)


if __name__ == "__main__":
    # Module "parameters": high_pass / low_pass cutoff (bpm), set deterministically.
    HIGH_PASS = 250.0
    LOW_PASS = 40.0

    key = jax.random.PRNGKey(0)
    k1, k2 = jax.random.split(key)
    B, C, H, N = 2, 3, 4, 32
    preds = jax.random.normal(k1, (B, C, H, N), dtype=jnp.float32)
    labels = jax.random.normal(k2, (B, C, H, N), dtype=jnp.float32)

    out = negative_max_cross_corr(preds, labels, HIGH_PASS, LOW_PASS, Fs=30)
    out = jax.block_until_ready(out)

    ref = jax.block_until_ready(_reference(preds, labels, HIGH_PASS, LOW_PASS, Fs=30))
    np.testing.assert_allclose(np.asarray(out), np.asarray(ref), rtol=1e-2, atol=1e-2)

    print("KERNEL_OK")
</pallas_src>

<mosaic_0001>
module attributes {stable_mosaic.version = 11 : i64} {
  func.func @kernel(%arg0: i32, %arg1: memref<24x32xf32, #tpu.memory_space<vmem>>, %arg2: memref<24x32xf32, #tpu.memory_space<vmem>>, %arg3: memref<32x256xbf16, #tpu.memory_space<vmem>>, %arg4: memref<256x64xbf16, #tpu.memory_space<vmem>>, %arg5: memref<1x128xf32, #tpu.memory_space<vmem>>, %arg6: memref<24x1xf32, #tpu.memory_space<vmem>>) attributes {dimension_semantics = [#tpu.dimension_semantics<parallel>], iteration_bounds = array<i64: 1>, scalar_prefetch = 0 : i64, scratch_operands = 0 : i64, tpu.core_type = #tpu.core_type<tc>, window_params = [{transform_indices = @transform_0, window_bounds = array<i64: 24, 32>}, {transform_indices = @transform_1, window_bounds = array<i64: 24, 32>}, {pipeline_mode = #tpu.pipeline_mode<synchronous>, transform_indices = @transform_2, window_bounds = array<i64: 32, 256>}, {pipeline_mode = #tpu.pipeline_mode<synchronous>, transform_indices = @transform_3, window_bounds = array<i64: 256, 64>}, {pipeline_mode = #tpu.pipeline_mode<synchronous>, transform_indices = @transform_4, window_bounds = array<i64: 1, 128>}, {transform_indices = @transform_5, window_bounds = array<i64: 24, 1>}]} {
    %c0 = arith.constant 0 : index
    %c0_0 = arith.constant 0 : index
    %0 = vector.load %arg1[%c0, %c0_0] : memref<24x32xf32, #tpu.memory_space<vmem>>, vector<24x32xf32>
    %c0_1 = arith.constant 0 : index
    %c0_2 = arith.constant 0 : index
    %1 = vector.load %arg2[%c0_1, %c0_2] : memref<24x32xf32, #tpu.memory_space<vmem>>, vector<24x32xf32>
    %cst = arith.constant dense<0.000000e+00> : vector<24xf32>
    %2 = vector.multi_reduction <add>, %0, %cst [1] : vector<24x32xf32> to vector<24xf32>
    %3 = vector.shape_cast %2 : vector<24xf32> to vector<24x1xf32>
    %cst_3 = arith.constant 3.200000e+01 : f32
    %4 = vector.broadcast %cst_3 : f32 to vector<24x1xf32>
    %5 = arith.divf %3, %4 : vector<24x1xf32>
    %6 = vector.broadcast %5 : vector<24x1xf32> to vector<24x32xf32>
    %7 = arith.subf %0, %6 : vector<24x32xf32>
    %cst_4 = arith.constant dense<0.000000e+00> : vector<24xf32>
    %8 = vector.multi_reduction <add>, %1, %cst_4 [1] : vector<24x32xf32> to vector<24xf32>
    %9 = vector.shape_cast %8 : vector<24xf32> to vector<24x1xf32>
    %cst_5 = arith.constant 3.200000e+01 : f32
    %10 = vector.broadcast %cst_5 : f32 to vector<24x1xf32>
    %11 = arith.divf %9, %10 : vector<24x1xf32>
    %12 = vector.broadcast %11 : vector<24x1xf32> to vector<24x32xf32>
    %13 = arith.subf %1, %12 : vector<24x32xf32>
    %14 = tpu.concatenate %7, %13 in 0 : vector<24x32xf32>, vector<24x32xf32> -> vector<48x32xf32>
    %15 = arith.truncf %14 : vector<48x32xf32> to vector<48x32xbf16>
    %c0_6 = arith.constant 0 : index
    %c0_7 = arith.constant 0 : index
    %16 = vector.load %arg3[%c0_6, %c0_7] : memref<32x256xbf16, #tpu.memory_space<vmem>>, vector<32x256xbf16>
    %cst_8 = arith.constant dense<0.000000e+00> : vector<48x256xf32>
    %17 = tpu.matmul %15, %16, %cst_8 {dimension_numbers = #tpu.dot_dimension_numbers<[1], [0], [0], [1], [0, 0, 1, 1], [], []>} : vector<48x32xbf16>, vector<32x256xbf16>, vector<48x256xf32> -> vector<48x256xf32>
    %18 = vector.extract_strided_slice %17 {offsets = [0, 0], sizes = [24, 256], strides = [1, 1]} : vector<48x256xf32> to vector<24x256xf32>
    %19 = vector.extract_strided_slice %17 {offsets = [24, 0], sizes = [24, 256], strides = [1, 1]} : vector<48x256xf32> to vector<24x256xf32>
    %20 = vector.extract_strided_slice %18 {offsets = [0, 0], sizes = [24, 128], strides = [1, 1]} : vector<24x256xf32> to vector<24x128xf32>
    %21 = vector.extract_strided_slice %18 {offsets = [0, 128], sizes = [24, 128], strides = [1, 1]} : vector<24x256xf32> to vector<24x128xf32>
    %22 = vector.extract_strided_slice %19 {offsets = [0, 0], sizes = [24, 128], strides = [1, 1]} : vector<24x256xf32> to vector<24x128xf32>
    %23 = vector.extract_strided_slice %19 {offsets = [0, 128], sizes = [24, 128], strides = [1, 1]} : vector<24x256xf32> to vector<24x128xf32>
    %24 = arith.mulf %20, %22 : vector<24x128xf32>
    %25 = arith.mulf %21, %23 : vector<24x128xf32>
    %26 = arith.addf %24, %25 : vector<24x128xf32>
    %27 = arith.mulf %21, %22 : vector<24x128xf32>
    %28 = arith.mulf %20, %23 : vector<24x128xf32>
    %29 = arith.subf %27, %28 : vector<24x128xf32>
    %30 = arith.mulf %26, %26 : vector<24x128xf32>
    %31 = arith.mulf %29, %29 : vector<24x128xf32>
    %32 = arith.addf %30, %31 : vector<24x128xf32>
    %33 = math.sqrt %32 : vector<24x128xf32>
    %c0_9 = arith.constant 0 : index
    %c0_10 = arith.constant 0 : index
    %34 = vector.load %arg5[%c0_9, %c0_10] : memref<1x128xf32, #tpu.memory_space<vmem>>, vector<1x128xf32>
    %35 = vector.broadcast %34 : vector<1x128xf32> to vector<24x128xf32>
    %36 = arith.mulf %33, %35 : vector<24x128xf32>
    %cst_11 = arith.constant dense<0.000000e+00> : vector<24xf32>
    %37 = vector.multi_reduction <add>, %36, %cst_11 [1] : vector<24x128xf32> to vector<24xf32>
    %38 = vector.shape_cast %37 : vector<24xf32> to vector<24x1xf32>
    %cst_12 = arith.constant dense<0.000000e+00> : vector<24xf32>
    %39 = vector.multi_reduction <add>, %33, %cst_12 [1] : vector<24x128xf32> to vector<24xf32>
    %40 = vector.shape_cast %39 : vector<24xf32> to vector<24x1xf32>
    %41 = arith.divf %38, %40 : vector<24x1xf32>
    %42 = tpu.concatenate %26, %29 in 1 : vector<24x128xf32>, vector<24x128xf32> -> vector<24x256xf32>
    %43 = arith.truncf %42 : vector<24x256xf32> to vector<24x256xbf16>
    %c0_13 = arith.constant 0 : index
    %c0_14 = arith.constant 0 : index
    %44 = vector.load %arg4[%c0_13, %c0_14] : memref<256x64xbf16, #tpu.memory_space<vmem>>, vector<256x64xbf16>
    %cst_15 = arith.constant dense<0.000000e+00> : vector<24x64xf32>
    %45 = tpu.matmul %43, %44, %cst_15 {dimension_numbers = #tpu.dot_dimension_numbers<[1], [0], [0], [1], [0, 0, 1, 1], [], []>} : vector<24x256xbf16>, vector<256x64xbf16>, vector<24x64xf32> -> vector<24x64xf32>
    %cst_16 = arith.constant dense<0xFF800000> : vector<24xf32>
    %46 = vector.multi_reduction <maximumf>, %45, %cst_16 [1] : vector<24x64xf32> to vector<24xf32>
    %47 = vector.shape_cast %46 : vector<24xf32> to vector<24x1xf32>
    %48 = arith.divf %47, %41 : vector<24x1xf32>
    %cst_17 = arith.constant 0.000000e+00 : f32
    %49 = vector.broadcast %cst_17 : f32 to vector<24x1xf32>
    %50 = arith.subf %49, %48 : vector<24x1xf32>
    %51 = arith.mulf %7, %7 : vector<24x32xf32>
    %cst_18 = arith.constant dense<0.000000e+00> : vector<24xf32>
    %52 = vector.multi_reduction <add>, %51, %cst_18 [1] : vector<24x32xf32> to vector<24xf32>
    %53 = vector.shape_cast %52 : vector<24xf32> to vector<24x1xf32>
    %cst_19 = arith.constant 0.0322580636 : f32
    %54 = vector.broadcast %cst_19 : f32 to vector<24x1xf32>
    %55 = arith.mulf %53, %54 : vector<24x1xf32>
    %56 = arith.mulf %13, %13 : vector<24x32xf32>
    %cst_20 = arith.constant dense<0.000000e+00> : vector<24xf32>
    %57 = vector.multi_reduction <add>, %56, %cst_20 [1] : vector<24x32xf32> to vector<24xf32>
    %58 = vector.shape_cast %57 : vector<24xf32> to vector<24x1xf32>
    %cst_21 = arith.constant 0.0322580636 : f32
    %59 = vector.broadcast %cst_21 : f32 to vector<24x1xf32>
    %60 = arith.mulf %58, %59 : vector<24x1xf32>
    %61 = arith.mulf %55, %60 : vector<24x1xf32>
    %62 = math.sqrt %61 : vector<24x1xf32>
    %63 = arith.divf %50, %62 : vector<24x1xf32>
    %c0_22 = arith.constant 0 : index
    %c0_23 = arith.constant 0 : index
    %64 = vector.load %arg6[%c0_22, %c0_23] : memref<24x1xf32, #tpu.memory_space<vmem>>, vector<24x1xf32>
    tpu.vector_store %arg6[%c0_22, %c0_23], %63 {strides = array<i32>} : memref<24x1xf32, #tpu.memory_space<vmem>>, vector<24x1xf32>,
    return
  }
  func.func @transform_0(%arg0: i32) -> (i32, i32) {
    %c0_i32 = arith.constant 0 : i32
    %c0_i32_0 = arith.constant 0 : i32
    return %arg0, %c0_i32 : i32, i32
  }
  func.func @transform_1(%arg0: i32) -> (i32, i32) {
    %c0_i32 = arith.constant 0 : i32
    %c0_i32_0 = arith.constant 0 : i32
    return %arg0, %c0_i32 : i32, i32
  }
  func.func @transform_2(%arg0: i32) -> (i32, i32) {
    %c0_i32 = arith.constant 0 : i32
    %c0_i32_0 = arith.constant 0 : i32
    %c0_i32_1 = arith.constant 0 : i32
    return %c0_i32, %c0_i32_0 : i32, i32
  }
  func.func @transform_3(%arg0: i32) -> (i32, i32) {
    %c0_i32 = arith.constant 0 : i32
    %c0_i32_0 = arith.constant 0 : i32
    %c0_i32_1 = arith.constant 0 : i32
    return %c0_i32, %c0_i32_0 : i32, i32
  }
  func.func @transform_4(%arg0: i32) -> (i32, i32) {
    %c0_i32 = arith.constant 0 : i32
    %c0_i32_0 = arith.constant 0 : i32
    %c0_i32_1 = arith.constant 0 : i32
    return %c0_i32, %c0_i32_0 : i32, i32
  }
  func.func @transform_5(%arg0: i32) -> (i32, i32) {
    %c0_i32 = arith.constant 0 : i32
    %c0_i32_0 = arith.constant 0 : i32
    return %arg0, %c0_i32 : i32, i32
  }
}

</mosaic_0001>

<llo_original>
// kernel: tpu_custom_call.1
$region0: #{tpu_custom_call.1}
  #allocation0 [shape = 'u32[]', space=smem, size = 0x4, offset = 0x4, fixed_abs, tag = 'smem constant byte address 0x4 - core index']
  #allocation1 [shape = 'u32[144,128]{1,0:T(1,128)}', space=vmem, size = 0x12000, scoped, tag = 'internal scratch']
  %s0 = inlined_call_operand.vmem [shape: f32[24,32], index: 0, kind: input, shape index: {}]
  %s1 = inlined_call_operand.vmem [shape: f32[24,32], index: 1, kind: input, shape index: {}]
  %s2 = inlined_call_operand.vmem [shape: bf16[32,256], index: 2, kind: input, shape index: {}]
  %s3 = inlined_call_operand.vmem [shape: bf16[256,64], index: 3, kind: input, shape index: {}]
  %s4 = inlined_call_operand.vmem [shape: f32[1,128], index: 4, kind: input, shape index: {}]
  %s5 = inlined_call_operand.vmem [shape: f32[24,1], index: 5, kind: output, shape index: {}]
  %s6 = sld [smem:[#allocation0]]
  $region30: #{tpu_custom_call.1} parent=0
    _
  %s8 = ssub.s32 1, %s6
  %s9 = scalar_select 0, %s8, %s6
  // Predicated region
  $region2: #{tpu_custom_call.1} parent=0 // pred_check
    _
  $region3: #{tpu_custom_call.1} parent=0 // pred_check_branch
    %11 = sbr.rel (0) target = $region5
  $region4: #{tpu_custom_call.1} parent=0 // pred_region
    _
  $region5: #{tpu_custom_call.1} parent=0 // pred_fallthru
    _
  // Predicated region
  $region6: #{tpu_custom_call.1} parent=0 // pred_check
    _
  $region7: #{tpu_custom_call.1} parent=0 // pred_check_branch
    %13 = sbr.rel (0) target = $region9
  $region8: #{tpu_custom_call.1} parent=0 // pred_region
    _
  $region9: #{tpu_custom_call.1} parent=0 // pred_fallthru
    _
  // Predicated region
  $region10: #{tpu_custom_call.1} parent=0 // pred_check
    _
  $region11: #{tpu_custom_call.1} parent=0 // pred_check_branch
    %15 = sbr.rel (0) target = $region13
  $region12: #{tpu_custom_call.1} parent=0 // pred_region
    _
  $region13: #{tpu_custom_call.1} parent=0 // pred_fallthru
    _
  // Predicated region
  $region14: #{tpu_custom_call.1} parent=0 // pred_check
    _
  $region15: #{tpu_custom_call.1} parent=0 // pred_check_branch
    %17 = sbr.rel (0) target = $region17
  $region16: #{tpu_custom_call.1} parent=0 // pred_region
    _
  $region17: #{tpu_custom_call.1} parent=0 // pred_fallthru
    _
  // Predicated region
  $region18: #{tpu_custom_call.1} parent=0 // pred_check
    _
  $region19: #{tpu_custom_call.1} parent=0 // pred_check_branch
    %19 = sbr.rel (0) target = $region21
  $region20: #{tpu_custom_call.1} parent=0 // pred_region
    _
  $region21: #{tpu_custom_call.1} parent=0 // pred_fallthru
    _
  %v21 = vld [vmem:[%s0] sm:$0xff]
  %v22 = vld [vmem:[%s0 + $0x8] sm:$0xff]
  %v23 = vld [vmem:[%s0 + $0x10] sm:$0xff]
  %v24 = vld [vmem:[%s1] sm:$0xff]
  %v25 = vld [vmem:[%s1 + $0x8] sm:$0xff]
  %v26 = vld [vmem:[%s1 + $0x10] sm:$0xff]
  %vm27 = vcmask 261120
  %v28 = vsel %vm27, %v21, 0.0
  %29 = vadd.xlane.f32.xlu0 %v28
  %v30 = vpop.xlane.xlu0 %29
  %v31 = vsel %vm27, %v22, 0.0
  %32 = vadd.xlane.f32.xlu0 %v31
  %v33 = vpop.xlane.xlu0 %32
  %v34 = vsel %vm27, %v23, 0.0
  %35 = vadd.xlane.f32.xlu0 %v34
  %v36 = vpop.xlane.xlu0 %35
  %v37 = vrcp.pop 32.0
  %v38 = vmul.f32 %v30, %v37
  %v39 = vmul.f32 %v33, %v37
  %v40 = vmul.f32 %v36, %v37
  %v41 = vsub.f32 %v21, %v38
  %v42 = vsub.f32 %v22, %v39
  %v43 = vsub.f32 %v23, %v40
  %v44 = vsel %vm27, %v24, 0.0
  %45 = vadd.xlane.f32.xlu0 %v44
  %v46 = vpop.xlane.xlu0 %45
  %v47 = vsel %vm27, %v25, 0.0
  %48 = vadd.xlane.f32.xlu0 %v47
  %v49 = vpop.xlane.xlu0 %48
  %v50 = vsel %vm27, %v26, 0.0
  %51 = vadd.xlane.f32.xlu0 %v50
  %v52 = vpop.xlane.xlu0 %51
  %v53 = vmul.f32 %v46, %v37
  %v54 = vmul.f32 %v49, %v37
  %v55 = vmul.f32 %v52, %v37
  %v56 = vsub.f32 %v24, %v53
  %v57 = vsub.f32 %v25, %v54
  %v58 = vsub.f32 %v26, %v55
  %v59 = vpack.c.bf16 %v42, %v41
  %v60 = vpack.c.bf16 %v56, %v43
  %v61 = vpack.c.bf16 %v58, %v57
  %v62 = vld [vmem:[%s2] sm:$0xff]
  %v63 = vld [vmem:[%s2 + $0x8] sm:$0xff]
  %v64 = vld [vmem:[%s2 + $0x10] sm:$0xff]
  %v65 = vld [vmem:[%s2 + $0x18] sm:$0xff]
  %v70 = vunpack.c.l.b16 %v62
  %v71 = vunpack.c.h.b16 %v62
  %v72 = vunpack.c.l.b16 %v63
  %v73 = vunpack.c.h.b16 %v63
  %v74 = vunpack.c.l.b16 %v64
  %v75 = vunpack.c.h.b16 %v64
  %v76 = vunpack.c.l.b16 %v65
  %v77 = vunpack.c.h.b16 %v65
  %v78 = vpack.c.b16 %v72, %v70
  %v79 = vpack.c.b16 %v73, %v71
  %v80 = vpack.c.b16 %v76, %v74
  %v81 = vpack.c.b16 %v77, %v75
  %v87 = vsel %vm27, %v59, 0
  %v90 = vsel %vm27, %v60, 0
  %v93 = vsel %vm27, %v61, 0
  %95 = vmatprep.subr.bf16.mxu0 0
  %96 = vmatpush1.bf16.msra.mxu0 0
  %97 = vmatprep.subr.bf16.mxu0 0
  %98 = vmatpush1.bf16.msra.mxu0 0
  %99 = vmatprep.subr.bf16.mxu0 0
  %100 = vmatpush1.bf16.msra.mxu0 0
  %101 = vmatprep.subr.bf16.mxu0 0
  %102 = vmatpush1.bf16.msra.mxu0 0
  %103 = vmatprep.subr.bf16.mxu0 0
  %104 = vmatpush1.bf16.msra.mxu0 0
  %105 = vmatprep.subr.bf16.mxu0 0
  %106 = vmatpush1.bf16.msra.mxu0 0
  %107 = vmatprep.subr.bf16.mxu0 %v81
  %108 = vmatpush1.bf16.msra.mxu0 %v80
  %109 = vmatprep.subr.bf16.mxu0 %v79
  %110 = vmatpush1.bf16.msra.mxu0 %v78
  %111 = vmatprep.subr.bf16.mxu0 0
  %112 = vmatpush2.bf16.msra.mxu0 0
  %113 = vmatprep.subr.bf16.mxu0 0
  %114 = vmatpush2.bf16.msra.mxu0 0
  %115 = vmatprep.subr.bf16.mxu0 0
  %116 = vmatpush2.bf16.msra.mxu0 0
  %117 = vmatprep.subr.bf16.mxu0 0
  %118 = vmatpush2.bf16.msra.mxu0 0
  %119 = vmatprep.subr.bf16.mxu0 0
  %120 = vmatpush2.bf16.msra.mxu0 0
  %121 = vmatprep.subr.bf16.mxu0 0
  %122 = vmatpush2.bf16.msra.mxu0 0
  %123 = vmatprep.subr.bf16.mxu0 0
  %124 = vmatpush2.bf16.msra.mxu0 0
  %125 = vmatprep.subr.bf16.mxu0 0
  %126 = vmatpush2.bf16.msra.mxu0 0
  %127 = vmatprep.mubr.bf16.mxu0 0
  %128 = vmatmul.mubr.bf16.gmra.mxu0 %v87
  %v129 = vpop.f32.mrf.mxu0
  %v130 = vadd.f32 0.0, %v129
  %v131 = vpop.f32.mrf.mxu0
  %v132 = vadd.f32 0.0, %v131
  %v133 = vpop.f32.mrf.mxu0
  %v134 = vadd.f32 0.0, %v133
  %v135 = vpop.f32.mrf.mxu0
  %v136 = vadd.f32 0.0, %v135
  %137 = vmatprep.mubr.bf16.mxu0 0
  %138 = vmatmul.mubr.bf16.gmra.mxu0 %v90
  %v139 = vpop.f32.mrf.mxu0
  %v140 = vadd.f32 0.0, %v139
  %v141 = vpop.f32.mrf.mxu0
  %v142 = vadd.f32 0.0, %v141
  %v143 = vpop.f32.mrf.mxu0
  %v144 = vadd.f32 0.0, %v143
  %v145 = vpop.f32.mrf.mxu0
  %v146 = vadd.f32 0.0, %v145
  %147 = vmatprep.mubr.bf16.mxu0 0
  %148 = vmatmul.mubr.bf16.gmra.mxu0 %v93
  %v149 = vpop.f32.mrf.mxu0
  %v150 = vadd.f32 0.0, %v149
  %v151 = vpop.f32.mrf.mxu0
  %v152 = vadd.f32 0.0, %v151
  %v153 = vpop.f32.mrf.mxu0
  %v154 = vadd.f32 0.0, %v153
  %v155 = vpop.f32.mrf.mxu0
  %v156 = vadd.f32 0.0, %v155
  %157 = vdwg.mxu0
  %v158 = vmul.f32 %v130, %v144
  %v159 = vmul.f32 %v134, %v150
  %v160 = vmul.f32 %v140, %v154
  %v161 = vmul.f32 %v132, %v146
  %v162 = vmul.f32 %v136, %v152
  %v163 = vmul.f32 %v142, %v156
  %v164 = vadd.f32 %v158, %v161
  %v165 = vadd.f32 %v159, %v162
  %v166 = vadd.f32 %v160, %v163
  %v167 = vmul.f32 %v132, %v144
  %v168 = vmul.f32 %v136, %v150
  %v169 = vmul.f32 %v142, %v154
  %v170 = vmul.f32 %v130, %v146
  %v171 = vmul.f32 %v134, %v152
  %v172 = vmul.f32 %v140, %v156
  %v173 = vsub.f32 %v167, %v170
  %v174 = vsub.f32 %v168, %v171
  %v175 = vsub.f32 %v169, %v172
  %v176 = vmul.f32 %v164, %v164
  %v177 = vmul.f32 %v165, %v165
  %v178 = vmul.f32 %v166, %v166
  %v179 = vmul.f32 %v173, %v173
  %v180 = vmul.f32 %v174, %v174
  %v181 = vmul.f32 %v175, %v175
  %v182 = vadd.f32 %v176, %v179
  %v183 = vadd.f32 %v177, %v180
  %v184 = vadd.f32 %v178, %v181
  %v185 = vrsqrt.pop %v182
  %v186 = vmul.f32 %v182, %v185
  %vm187 = vcmp.eq.f32.partialorder %v182, inf
  %v188 = vsel %vm187, %v182, %v186
  %vm189 = vcmp.eq.f32.partialorder %v182, 0.0
  %v190 = vand.u32 %v182, 2147483648
  %v191 = vsel %vm189, %v190, %v188
  %v192 = vrsqrt.pop %v183
  %v193 = vmul.f32 %v183, %v192
  %vm194 = vcmp.eq.f32.partialorder %v183, inf
  %v195 = vsel %vm194, %v183, %v193
  %vm196 = vcmp.eq.f32.partialorder %v183, 0.0
  %v197 = vand.u32 %v183, 2147483648
  %v198 = vsel %vm196, %v197, %v195
  %v199 = vrsqrt.pop %v184
  %v200 = vmul.f32 %v184, %v199
  %vm201 = vcmp.eq.f32.partialorder %v184, inf
  %v202 = vsel %vm201, %v184, %v200
  %vm203 = vcmp.eq.f32.partialorder %v184, 0.0
  %v204 = vand.u32 %v184, 2147483648
  %v205 = vsel %vm203, %v204, %v202
  %v206 = vld [vmem:[%s4] sm:$0x1]
  %v208 = vlaneseq
  %v209 = vshrl.u32 %v208, 7
  %v210 = vsub.s32 0, %v209
  %v211 = vrot.slane %v206, %v210
  %v213 = vmul.f32 %v191, %v211
  %v214 = vmul.f32 %v198, %v211
  %v215 = vmul.f32 %v205, %v211
  %216 = vadd.xlane.f32.xlu0 %v213
  %v217 = vpop.xlane.xlu0 %216
  %218 = vadd.xlane.f32.xlu0 %v214
  %v219 = vpop.xlane.xlu0 %218
  %220 = vadd.xlane.f32.xlu0 %v215
  %v221 = vpop.xlane.xlu0 %220
  %222 = vadd.xlane.f32.xlu0 %v191
  %v223 = vpop.xlane.xlu0 %222
  %224 = vadd.xlane.f32.xlu0 %v198
  %v225 = vpop.xlane.xlu0 %224
  %226 = vadd.xlane.f32.xlu0 %v205
  %v227 = vpop.xlane.xlu0 %226
  %v228 = vrcp.pop %v223
  %v229 = vmul.f32 %v217, %v228
  %v230 = vrcp.pop %v225
  %v231 = vmul.f32 %v219, %v230
  %v232 = vrcp.pop %v227
  %v233 = vmul.f32 %v221, %v232
  %v234 = vpack.c.bf16 %v165, %v164
  %v235 = vpack.c.bf16 %v174, %v173
  %v236 = vpack.c.bf16 %v166, %v166
  %v237 = vpack.c.bf16 %v175, %v175
  %v238 = vld [vmem:[%s3] sm:$0xf]
  %v239 = vld [vmem:[%s3 + $0x4] sm:$0xf]
  %v240 = vld [vmem:[%s3 + $0x8] sm:$0xf]
  %v241 = vld [vmem:[%s3 + $0xc] sm:$0xf]
  %v242 = vld [vmem:[%s3 + $0x10] sm:$0xf]
  %v243 = vld [vmem:[%s3 + $0x14] sm:$0xf]
  %v244 = vld [vmem:[%s3 + $0x18] sm:$0xf]
  %v245 = vld [vmem:[%s3 + $0x1c] sm:$0xf]
  %v246 = vld [vmem:[%s3 + $0x20] sm:$0xf]
  %v247 = vld [vmem:[%s3 + $0x24] sm:$0xf]
  %v248 = vld [vmem:[%s3 + $0x28] sm:$0xf]
  %v249 = vld [vmem:[%s3 + $0x2c] sm:$0xf]
  %v250 = vld [vmem:[%s3 + $0x30] sm:$0xf]
  %v251 = vld [vmem:[%s3 + $0x34] sm:$0xf]
  %v252 = vld [vmem:[%s3 + $0x38] sm:$0xf]
  %v253 = vld [vmem:[%s3 + $0x3c] sm:$0xf]
  %v254 = vld [vmem:[%s3 + $0x40] sm:$0xf]
  %v255 = vld [vmem:[%s3 + $0x44] sm:$0xf]
  %v256 = vld [vmem:[%s3 + $0x48] sm:$0xf]
  %v257 = vld [vmem:[%s3 + $0x4c] sm:$0xf]
  %v258 = vld [vmem:[%s3 + $0x50] sm:$0xf]
  %v259 = vld [vmem:[%s3 + $0x54] sm:$0xf]
  %v260 = vld [vmem:[%s3 + $0x58] sm:$0xf]
  %v261 = vld [vmem:[%s3 + $0x5c] sm:$0xf]
  %v262 = vld [vmem:[%s3 + $0x60] sm:$0xf]
  %v263 = vld [vmem:[%s3 + $0x64] sm:$0xf]
  %v264 = vld [vmem:[%s3 + $0x68] sm:$0xf]
  %v265 = vld [vmem:[%s3 + $0x6c] sm:$0xf]
  %v266 = vld [vmem:[%s3 + $0x70] sm:$0xf]
  %v267 = vld [vmem:[%s3 + $0x74] sm:$0xf]
  %v268 = vld [vmem:[%s3 + $0x78] sm:$0xf]
  %v269 = vld [vmem:[%s3 + $0x7c] sm:$0xf]
  %v302 = vunpack.c.l.b16 %v238
  %v303 = vunpack.c.l.b16 %v239
  %v304 = vunpack.c.l.b16 %v240
  %v305 = vunpack.c.l.b16 %v241
  %v306 = vunpack.c.l.b16 %v242
  %v307 = vunpack.c.l.b16 %v243
  %v308 = vunpack.c.l.b16 %v244
  %v309 = vunpack.c.l.b16 %v245
  %v310 = vunpack.c.l.b16 %v246
  %v311 = vunpack.c.l.b16 %v247
  %v312 = vunpack.c.l.b16 %v248
  %v313 = vunpack.c.l.b16 %v249
  %v314 = vunpack.c.l.b16 %v250
  %v315 = vunpack.c.l.b16 %v251
  %v316 = vunpack.c.l.b16 %v252
  %v317 = vunpack.c.l.b16 %v253
  %v318 = vunpack.c.l.b16 %v254
  %v319 = vunpack.c.l.b16 %v255
  %v320 = vunpack.c.l.b16 %v256
  %v321 = vunpack.c.l.b16 %v257
  %v322 = vunpack.c.l.b16 %v258
  %v323 = vunpack.c.l.b16 %v259
  %v324 = vunpack.c.l.b16 %v260
  %v325 = vunpack.c.l.b16 %v261
  %v326 = vunpack.c.l.b16 %v262
  %v327 = vunpack.c.l.b16 %v263
  %v328 = vunpack.c.l.b16 %v264
  %v329 = vunpack.c.l.b16 %v265
  %v330 = vunpack.c.l.b16 %v266
  %v331 = vunpack.c.l.b16 %v267
  %v332 = vunpack.c.l.b16 %v268
  %v333 = vunpack.c.l.b16 %v269
  %v334 = vpack.c.b16 %v303, %v302
  %v335 = vpack.c.b16 %v305, %v304
  %v336 = vpack.c.b16 %v307, %v306
  %v337 = vpack.c.b16 %v309, %v308
  %v338 = vpack.c.b16 %v311, %v310
  %v339 = vpack.c.b16 %v313, %v312
  %v340 = vpack.c.b16 %v315, %v314
  %v341 = vpack.c.b16 %v317, %v316
  %v342 = vpack.c.b16 %v319, %v318
  %v343 = vpack.c.b16 %v321, %v320
  %v344 = vpack.c.b16 %v323, %v322
  %v345 = vpack.c.b16 %v325, %v324
  %v346 = vpack.c.b16 %v327, %v326
  %v347 = vpack.c.b16 %v329, %v328
  %v348 = vpack.c.b16 %v331, %v330
  %v349 = vpack.c.b16 %v333, %v332
  %366 = vmatprep.subr.bf16.mxu0 0
  %367 = vmatpush1.bf16.msra.mxu0 %v341
  %368 = vmatprep.subr.bf16.mxu0 0
  %369 = vmatpush1.bf16.msra.mxu0 %v340
  %370 = vmatprep.subr.bf16.mxu0 0
  %371 = vmatpush1.bf16.msra.mxu0 %v339
  %372 = vmatprep.subr.bf16.mxu0 0
  %373 = vmatpush1.bf16.msra.mxu0 %v338
  %374 = vmatprep.subr.bf16.mxu0 0
  %375 = vmatpush1.bf16.msra.mxu0 %v337
  %376 = vmatprep.subr.bf16.mxu0 0
  %377 = vmatpush1.bf16.msra.mxu0 %v336
  %378 = vmatprep.subr.bf16.mxu0 0
  %379 = vmatpush1.bf16.msra.mxu0 %v335
  %380 = vmatprep.subr.bf16.mxu0 0
  %381 = vmatpush1.bf16.msra.mxu0 %v334
  %382 = vmatprep.subr.bf16.mxu0 0
  %383 = vmatpush2.bf16.msra.mxu0 %v349
  %384 = vmatprep.subr.bf16.mxu0 0
  %385 = vmatpush2.bf16.msra.mxu0 %v348
  %386 = vmatprep.subr.bf16.mxu0 0
  %387 = vmatpush2.bf16.msra.mxu0 %v347
  %388 = vmatprep.subr.bf16.mxu0 0
  %389 = vmatpush2.bf16.msra.mxu0 %v346
  %390 = vmatprep.subr.bf16.mxu0 0
  %391 = vmatpush2.bf16.msra.mxu0 %v345
  %392 = vmatprep.subr.bf16.mxu0 0
  %393 = vmatpush2.bf16.msra.mxu0 %v344
  %394 = vmatprep.subr.bf16.mxu0 0
  %395 = vmatpush2.bf16.msra.mxu0 %v343
  %396 = vmatprep.subr.bf16.mxu0 0
  %397 = vmatpush2.bf16.msra.mxu0 %v342
  %398 = vmatprep.mubr.bf16.mxu0 %v235
  %399 = vmatmul.mubr.bf16.gmra.mxu0 %v234
  %v400 = vpop.f32.mrf.mxu0
  %v401 = vadd.f32 0.0, %v400
  %v402 = vpop.f32.mrf.mxu0
  %v403 = vpop.f32.mrf.mxu0
  %v404 = vadd.f32 0.0, %v403
  %v405 = vpop.f32.mrf.mxu0
  %406 = vmatprep.mubr.bf16.mxu0 %v237
  %407 = vmatmul.mubr.bf16.gmra.mxu0 %v236
  %v408 = vpop.f32.mrf.mxu0
  %v409 = vadd.f32 0.0, %v408
  %v410 = vpop.f32.mrf.mxu0
  %v411 = vpop.f32.mrf.mxu0
  %v412 = vpop.f32.mrf.mxu0
  %413 = vdwg.mxu0
  %vm414 = vcmask 523264
  %v415 = vsel %vm414, %v401, -inf
  %416 = vmax.xlane.f32.xlu0 %v415
  %v417 = vpop.xlane.xlu0 %416
  %v418 = vsel %vm414, %v404, -inf
  %419 = vmax.xlane.f32.xlu0 %v418
  %v420 = vpop.xlane.xlu0 %419
  %v421 = vsel %vm414, %v409, -inf
  %422 = vmax.xlane.f32.xlu0 %v421
  %v423 = vpop.xlane.xlu0 %422
  %v424 = vrcp.pop %v229
  %v425 = vmul.f32 %v417, %v424
  %v426 = vrcp.pop %v231
  %v427 = vmul.f32 %v420, %v426
  %v428 = vrcp.pop %v233
  %v429 = vmul.f32 %v423, %v428
  %v430 = vsub.f32 0.0, %v425
  %v431 = vsub.f32 0.0, %v427
  %v432 = vsub.f32 0.0, %v429
  %v433 = vmul.f32 %v41, %v41
  %v434 = vmul.f32 %v42, %v42
  %v435 = vmul.f32 %v43, %v43
  %v436 = vsel %vm27, %v433, 0.0
  %437 = vadd.xlane.f32.xlu0 %v436
  %v438 = vpop.xlane.xlu0 %437
  %v439 = vsel %vm27, %v434, 0.0
  %440 = vadd.xlane.f32.xlu0 %v439
  %v441 = vpop.xlane.xlu0 %440
  %v442 = vsel %vm27, %v435, 0.0
  %443 = vadd.xlane.f32.xlu0 %v442
  %v444 = vpop.xlane.xlu0 %443
  %v445 = vmul.f32 %v438, 0.032258064
  %v446 = vmul.f32 %v441, 0.032258064
  %v447 = vmul.f32 %v444, 0.032258064
  %v448 = vmul.f32 %v56, %v56
  %v449 = vmul.f32 %v57, %v57
  %v450 = vmul.f32 %v58, %v58
  %v451 = vsel %vm27, %v448, 0.0
  %452 = vadd.xlane.f32.xlu0 %v451
  %v453 = vpop.xlane.xlu0 %452
  %v454 = vsel %vm27, %v449, 0.0
  %455 = vadd.xlane.f32.xlu0 %v454
  %v456 = vpop.xlane.xlu0 %455
  %v457 = vsel %vm27, %v450, 0.0
  %458 = vadd.xlane.f32.xlu0 %v457
  %v459 = vpop.xlane.xlu0 %458
  %v460 = vmul.f32 %v453, 0.032258064
  %v461 = vmul.f32 %v456, 0.032258064
  %v462 = vmul.f32 %v459, 0.032258064
  %v463 = vmul.f32 %v445, %v460
  %v464 = vmul.f32 %v446, %v461
  %v465 = vmul.f32 %v447, %v462
  %v466 = vrsqrt.pop %v463
  %v467 = vmul.f32 %v463, %v466
  %vm468 = vcmp.eq.f32.partialorder %v463, inf
  %v469 = vsel %vm468, %v463, %v467
  %vm470 = vcmp.eq.f32.partialorder %v463, 0.0
  %v471 = vand.u32 %v463, 2147483648
  %v472 = vsel %vm470, %v471, %v469
  %v473 = vrsqrt.pop %v464
  %v474 = vmul.f32 %v464, %v473
  %vm475 = vcmp.eq.f32.partialorder %v464, inf
  %v476 = vsel %vm475, %v464, %v474
  %vm477 = vcmp.eq.f32.partialorder %v464, 0.0
  %v478 = vand.u32 %v464, 2147483648
  %v479 = vsel %vm477, %v478, %v476
  %v480 = vrsqrt.pop %v465
  %v481 = vmul.f32 %v465, %v480
  %vm482 = vcmp.eq.f32.partialorder %v465, inf
  %v483 = vsel %vm482, %v465, %v481
  %vm484 = vcmp.eq.f32.partialorder %v465, 0.0
  %v485 = vand.u32 %v465, 2147483648
  %v486 = vsel %vm484, %v485, %v483
  %v487 = vrcp.pop %v472
  %v488 = vmul.f32 %v430, %v487
  %v489 = vrcp.pop %v479
  %v490 = vmul.f32 %v431, %v489
  %v491 = vrcp.pop %v486
  %v492 = vmul.f32 %v432, %v491
  %vm493 = vcmask 7168
  %494 = vst.msk [vmem:[%s5] sm:$0xff] %vm493, %v488
  %495 = vst.msk [vmem:[%s5 + $0x8] sm:$0xff] %vm493, %v490
  %496 = vst.msk [vmem:[%s5 + $0x10] sm:$0xff] %vm493, %v492
  // Predicated region
  $region22: #{tpu_custom_call.1} parent=0 // pred_check
    _
  $region23: #{tpu_custom_call.1} parent=0 // pred_check_branch
    %498 = sbr.rel (0) target = $region25
  $region24: #{tpu_custom_call.1} parent=0 // pred_region
    _
  $region25: #{tpu_custom_call.1} parent=0 // pred_fallthru
    _
  // Predicated region
  $region26: #{tpu_custom_call.1} parent=0 // pred_check
    _
  $region27: #{tpu_custom_call.1} parent=0 // pred_check_branch
    %500 = sbr.rel (0) target = $region29
  $region28: #{tpu_custom_call.1} parent=0 // pred_region
    _
  $region29: #{tpu_custom_call.1} parent=0 // pred_fallthru
    _

</llo_original>
